<compile_context>
chip_gen: v7x
topology: tpu7x:2x2x1
jax: 0.10.0
libtpu: 0.0.40
codegen_flags: <defaults>
</compile_context>

<pallas_src>
import jax
import jax.numpy as jnp
from jax.experimental import pallas as pl
from jax.experimental.pallas import tpu as pltpu

_LANES = 1024          # lane-dense last dim (8 full vregs wide)
_MAX_TILE_ROWS = 256   # (256, 1024) f32 tile = 1 MiB -> 4 inputs x 2 bufs = 8 MiB
_NUM_CORES = 2         # shard row grid 2-way ("parallel") for v7x megacore;
                       # harmless extra outer loop on single-TC v5e/v6e.


def _loss_kernel(pp_ref, pt_ref, tp_ref, tt_ref, out_ref, acc_p_ref, acc_t_ref):
    i = pl.program_id(1)

    @pl.when(i == 0)
    def _init():
        acc_p_ref[...] = jnp.zeros_like(acc_p_ref)
        acc_t_ref[...] = jnp.zeros_like(acc_t_ref)

    # Pure VPU per-tile work (mem-bound kernel: keep the binding slot at vld).
    dp = pp_ref[...].astype(jnp.float32) - pt_ref[...].astype(jnp.float32)
    dt = tp_ref[...].astype(jnp.float32) - tt_ref[...].astype(jnp.float32)
    acc_p_ref[...] += dp * dp
    acc_t_ref[...] += dt * dt

    @pl.when(i == pl.num_programs(1) - 1)
    def _finalize():
        # One cross-lane (XLU) reduction per core, at the very end.
        sum_p = jnp.sum(acc_p_ref[...])
        sum_t = jnp.sum(acc_t_ref[...])
        zeros = jnp.zeros((8, 128), jnp.float32)
        out_ref[0, 0] = sum_p + zeros
        out_ref[0, 1] = sum_t + zeros


def performance_custom_loss(pressure_pred, temperature_pred,
                            pressure_true, temperature_true,
                            alpha=1.0, beta=1.0):
    # Same semantics as the PyTorch module: squeeze the channel dim.
    pp = jnp.squeeze(pressure_pred, axis=1)
    tp = jnp.squeeze(temperature_pred, axis=1)
    pt = pressure_true
    tt = temperature_true

    n_p = pp.size   # ORIGINAL element counts (MSE divisors), not padded sizes.
    n_t = tp.size

    # Lane-dense slab geometry shared by all four arrays.
    max_n = max(pp.size, pt.size, tp.size, tt.size)
    rows_min = -(-max_n // _LANES)                 # ceil
    rows_min = max(8, ((rows_min + 7) // 8) * 8)   # sublane multiple
    tile_r = min(_MAX_TILE_ROWS, rows_min)
    chunk = _NUM_CORES * tile_r
    rows = ((rows_min + chunk - 1) // chunk) * chunk
    n_tiles_per_core = rows // (_NUM_CORES * tile_r)

    def to_slab(x):
        flat = jnp.ravel(x)
        pad = rows * _LANES - flat.size
        # Zero padding in BOTH pred and true -> padded diffs are exactly 0.
        flat = jnp.pad(flat, (0, pad))
        return flat.reshape(rows, _LANES)

    pp_s, pt_s, tp_s, tt_s = to_slab(pp), to_slab(pt), to_slab(tp), to_slab(tt)

    def row_map(c, i):
        return (c * n_tiles_per_core + i, 0)

    in_spec = pl.BlockSpec((tile_r, _LANES), row_map)

    grid_spec = pltpu.PrefetchScalarGridSpec(
        num_scalar_prefetch=0,
        grid=(_NUM_CORES, n_tiles_per_core),
        in_specs=[in_spec, in_spec, in_spec, in_spec],
        out_specs=pl.BlockSpec((1, 2, 8, 128), lambda c, i: (c, 0, 0, 0)),
        scratch_shapes=[
            pltpu.VMEM((tile_r, _LANES), jnp.float32),
            pltpu.VMEM((tile_r, _LANES), jnp.float32),
        ],
    )

    bytes_accessed = (pp_s.nbytes + pt_s.nbytes + tp_s.nbytes + tt_s.nbytes
                      + _NUM_CORES * 2 * 8 * 128 * 4)
    cost = pl.CostEstimate(flops=3 * (pp_s.size + tp_s.size),
                           transcendentals=0,
                           bytes_accessed=bytes_accessed)

    partials = pl.pallas_call(
        _loss_kernel,
        out_shape=jax.ShapeDtypeStruct((_NUM_CORES, 2, 8, 128), jnp.float32),
        grid_spec=grid_spec,
        compiler_params=pltpu.CompilerParams(
            dimension_semantics=("parallel", "arbitrary"),
            vmem_limit_bytes=32 * 1024 * 1024),
        cost_estimate=cost,
    )(pp_s, pt_s, tp_s, tt_s)

    # Tiny weighted combine in plain JAX (keeps alpha/beta out of the kernel).
    sum_p = jnp.sum(partials[:, 0, 0, 0])
    sum_t = jnp.sum(partials[:, 1, 0, 0])
    return alpha * sum_p / n_p + beta * sum_t / n_t


if __name__ == "__main__":
    key = jax.random.PRNGKey(0)
    k1, k2, k3, k4 = jax.random.split(key, 4)

    B, H, W = 2, 16, 16
    pressure_pred = jax.random.normal(k1, (B, 1, H, W), dtype=jnp.float32)
    temperature_pred = jax.random.normal(k2, (B, 1, H, W), dtype=jnp.float32)
    pressure_true = jax.random.normal(k3, (B, H, W), dtype=jnp.float32)
    temperature_true = jax.random.normal(k4, (B, H, W), dtype=jnp.float32)

    loss = performance_custom_loss(pressure_pred, temperature_pred,
                                   pressure_true, temperature_true,
                                   alpha=1.0, beta=1.0)
    loss = jax.block_until_ready(loss)

    # Reference (same semantics as torch nn.MSELoss mean reduction).
    ref = (jnp.mean((jnp.squeeze(pressure_pred, 1) - pressure_true) ** 2)
           + jnp.mean((jnp.squeeze(temperature_pred, 1) - temperature_true) ** 2))
    assert jnp.allclose(loss, ref, rtol=1e-5, atol=1e-6), (loss, ref)

    print("KERNEL_OK")
</pallas_src>

<mosaic_0001>
module attributes {stable_mosaic.version = 11 : i64} {
  func.func @_loss_kernel(%arg0: i32, %arg1: i32, %arg2: memref<8x1024xf32, #tpu.memory_space<vmem>>, %arg3: memref<8x1024xf32, #tpu.memory_space<vmem>>, %arg4: memref<8x1024xf32, #tpu.memory_space<vmem>>, %arg5: memref<8x1024xf32, #tpu.memory_space<vmem>>, %arg6: memref<1x2x8x128xf32, #tpu.memory_space<vmem>>, %arg7: memref<8x1024xf32, #tpu.memory_space<vmem>>, %arg8: memref<8x1024xf32, #tpu.memory_space<vmem>>) attributes {dimension_semantics = [#tpu.dimension_semantics<parallel>, #tpu.dimension_semantics<arbitrary>], iteration_bounds = array<i64: 2, 1>, scalar_prefetch = 0 : i64, scratch_operands = 2 : i64, tpu.core_type = #tpu.core_type<tc>, window_params = [{transform_indices = @transform_0, window_bounds = array<i64: 8, 1024>}, {transform_indices = @transform_1, window_bounds = array<i64: 8, 1024>}, {transform_indices = @transform_2, window_bounds = array<i64: 8, 1024>}, {transform_indices = @transform_3, window_bounds = array<i64: 8, 1024>}, {transform_indices = @transform_4, window_bounds = array<i64: 1, 2, 8, 128>}]} {
    %c0_i32 = arith.constant 0 : i32
    %0 = arith.cmpi eq, %arg1, %c0_i32 : i32
    %1 = arith.extui %0 : i1 to i32
    %c0_i32_0 = arith.constant 0 : i32
    %2 = arith.cmpi ne, %1, %c0_i32_0 : i32
    scf.if %2 {
      %cst = arith.constant 0.000000e+00 : f32
      %20 = vector.broadcast %cst : f32 to vector<8x1024xf32>
      %c0_18 = arith.constant 0 : index
      %c0_19 = arith.constant 0 : index
      %21 = vector.load %arg7[%c0_18, %c0_19] : memref<8x1024xf32, #tpu.memory_space<vmem>>, vector<8x1024xf32>
      tpu.vector_store %arg7[%c0_18, %c0_19], %20 {strides = array<i32>} : memref<8x1024xf32, #tpu.memory_space<vmem>>, vector<8x1024xf32>,
      %cst_20 = arith.constant 0.000000e+00 : f32
      %22 = vector.broadcast %cst_20 : f32 to vector<8x1024xf32>
      %c0_21 = arith.constant 0 : index
      %c0_22 = arith.constant 0 : index
      %23 = vector.load %arg8[%c0_21, %c0_22] : memref<8x1024xf32, #tpu.memory_space<vmem>>, vector<8x1024xf32>
      tpu.vector_store %arg8[%c0_21, %c0_22], %22 {strides = array<i32>} : memref<8x1024xf32, #tpu.memory_space<vmem>>, vector<8x1024xf32>,
    } else {
    }
    %c0 = arith.constant 0 : index
    %c0_1 = arith.constant 0 : index
    %3 = vector.load %arg2[%c0, %c0_1] : memref<8x1024xf32, #tpu.memory_space<vmem>>, vector<8x1024xf32>
    %c0_2 = arith.constant 0 : index
    %c0_3 = arith.constant 0 : index
    %4 = vector.load %arg3[%c0_2, %c0_3] : memref<8x1024xf32, #tpu.memory_space<vmem>>, vector<8x1024xf32>
    %5 = arith.subf %3, %4 : vector<8x1024xf32>
    %c0_4 = arith.constant 0 : index
    %c0_5 = arith.constant 0 : index
    %6 = vector.load %arg4[%c0_4, %c0_5] : memref<8x1024xf32, #tpu.memory_space<vmem>>, vector<8x1024xf32>
    %c0_6 = arith.constant 0 : index
    %c0_7 = arith.constant 0 : index
    %7 = vector.load %arg5[%c0_6, %c0_7] : memref<8x1024xf32, #tpu.memory_space<vmem>>, vector<8x1024xf32>
    %8 = arith.subf %6, %7 : vector<8x1024xf32>
    %c0_8 = arith.constant 0 : index
    %c0_9 = arith.constant 0 : index
    %9 = vector.load %arg7[%c0_8, %c0_9] : memref<8x1024xf32, #tpu.memory_space<vmem>>, vector<8x1024xf32>
    %10 = arith.mulf %5, %5 : vector<8x1024xf32>
    %11 = arith.addf %9, %10 : vector<8x1024xf32>
    %c0_10 = arith.constant 0 : index
    %c0_11 = arith.constant 0 : index
    %12 = vector.load %arg7[%c0_10, %c0_11] : memref<8x1024xf32, #tpu.memory_space<vmem>>, vector<8x1024xf32>
    tpu.vector_store %arg7[%c0_10, %c0_11], %11 {strides = array<i32>} : memref<8x1024xf32, #tpu.memory_space<vmem>>, vector<8x1024xf32>,
    %c0_12 = arith.constant 0 : index
    %c0_13 = arith.constant 0 : index
    %13 = vector.load %arg8[%c0_12, %c0_13] : memref<8x1024xf32, #tpu.memory_space<vmem>>, vector<8x1024xf32>
    %14 = arith.mulf %8, %8 : vector<8x1024xf32>
    %15 = arith.addf %13, %14 : vector<8x1024xf32>
    %c0_14 = arith.constant 0 : index
    %c0_15 = arith.constant 0 : index
    %16 = vector.load %arg8[%c0_14, %c0_15] : memref<8x1024xf32, #tpu.memory_space<vmem>>, vector<8x1024xf32>
    tpu.vector_store %arg8[%c0_14, %c0_15], %15 {strides = array<i32>} : memref<8x1024xf32, #tpu.memory_space<vmem>>, vector<8x1024xf32>,
    %c0_i32_16 = arith.constant 0 : i32
    %17 = arith.cmpi eq, %arg1, %c0_i32_16 : i32
    %18 = arith.extui %17 : i1 to i32
    %c0_i32_17 = arith.constant 0 : i32
    %19 = arith.cmpi ne, %18, %c0_i32_17 : i32
    scf.if %19 {
      %c0_18 = arith.constant 0 : index
      %c0_19 = arith.constant 0 : index
      %20 = vector.load %arg7[%c0_18, %c0_19] : memref<8x1024xf32, #tpu.memory_space<vmem>>, vector<8x1024xf32>
      %21 = vector.shape_cast %20 : vector<8x1024xf32> to vector<1x8x1024xf32>
      %cst = arith.constant dense<0.000000e+00> : vector<1xf32>
      %22 = vector.multi_reduction <add>, %21, %cst [1, 2] : vector<1x8x1024xf32> to vector<1xf32>
      %23 = vector.shape_cast %22 : vector<1xf32> to vector<1x1x1xf32>
      %24 = vector.extract %23[0, 0, 0] : f32 from vector<1x1x1xf32>
      %c0_20 = arith.constant 0 : index
      %c0_21 = arith.constant 0 : index
      %25 = vector.load %arg8[%c0_20, %c0_21] : memref<8x1024xf32, #tpu.memory_space<vmem>>, vector<8x1024xf32>
      %26 = vector.shape_cast %25 : vector<8x1024xf32> to vector<1x8x1024xf32>
      %cst_22 = arith.constant dense<0.000000e+00> : vector<1xf32>
      %27 = vector.multi_reduction <add>, %26, %cst_22 [1, 2] : vector<1x8x1024xf32> to vector<1xf32>
      %28 = vector.shape_cast %27 : vector<1xf32> to vector<1x1x1xf32>
      %29 = vector.extract %28[0, 0, 0] : f32 from vector<1x1x1xf32>
      %cst_23 = arith.constant 0.000000e+00 : f32
      %30 = vector.broadcast %cst_23 : f32 to vector<8x128xf32>
      %31 = vector.broadcast %24 : f32 to vector<8x128xf32>
      %32 = arith.addf %31, %30 : vector<8x128xf32>
      %c0_24 = arith.constant 0 : index
      %c0_25 = arith.constant 0 : index
      %c0_26 = arith.constant 0 : index
      %c0_27 = arith.constant 0 : index
      %33 = vector.load %arg6[%c0_24, %c0_25, %c0_26, %c0_27] : memref<1x2x8x128xf32, #tpu.memory_space<vmem>>, vector<1x1x8x128xf32>
      %34 = vector.shape_cast %33 : vector<1x1x8x128xf32> to vector<8x128xf32>
      %35 = vector.shape_cast %32 : vector<8x128xf32> to vector<1x1x8x128xf32>
      tpu.vector_store %arg6[%c0_24, %c0_25, %c0_26, %c0_27], %35 {strides = array<i32>} : memref<1x2x8x128xf32, #tpu.memory_space<vmem>>, vector<1x1x8x128xf32>,
      %36 = vector.broadcast %29 : f32 to vector<8x128xf32>
      %37 = arith.addf %36, %30 : vector<8x128xf32>
      %c0_28 = arith.constant 0 : index
      %c1 = arith.constant 1 : index
      %c0_29 = arith.constant 0 : index
      %c0_30 = arith.constant 0 : index
      %38 = vector.load %arg6[%c0_28, %c1, %c0_29, %c0_30] : memref<1x2x8x128xf32, #tpu.memory_space<vmem>>, vector<1x1x8x128xf32>
      %39 = vector.shape_cast %38 : vector<1x1x8x128xf32> to vector<8x128xf32>
      %40 = vector.shape_cast %37 : vector<8x128xf32> to vector<1x1x8x128xf32>
      tpu.vector_store %arg6[%c0_28, %c1, %c0_29, %c0_30], %40 {strides = array<i32>} : memref<1x2x8x128xf32, #tpu.memory_space<vmem>>, vector<1x1x8x128xf32>,
    } else {
    }
    return
  }
  func.func @transform_0(%arg0: i32, %arg1: i32) -> (i32, i32) {
    %c1_i32 = arith.constant 1 : i32
    %0 = arith.muli %arg0, %c1_i32 : i32
    %1 = arith.addi %0, %arg1 : i32
    %c0_i32 = arith.constant 0 : i32
    %c0_i32_0 = arith.constant 0 : i32
    return %1, %c0_i32 : i32, i32
  }
  func.func @transform_1(%arg0: i32, %arg1: i32) -> (i32, i32) {
    %c1_i32 = arith.constant 1 : i32
    %0 = arith.muli %arg0, %c1_i32 : i32
    %1 = arith.addi %0, %arg1 : i32
    %c0_i32 = arith.constant 0 : i32
    %c0_i32_0 = arith.constant 0 : i32
    return %1, %c0_i32 : i32, i32
  }
  func.func @transform_2(%arg0: i32, %arg1: i32) -> (i32, i32) {
    %c1_i32 = arith.constant 1 : i32
    %0 = arith.muli %arg0, %c1_i32 : i32
    %1 = arith.addi %0, %arg1 : i32
    %c0_i32 = arith.constant 0 : i32
    %c0_i32_0 = arith.constant 0 : i32
    return %1, %c0_i32 : i32, i32
  }
  func.func @transform_3(%arg0: i32, %arg1: i32) -> (i32, i32) {
    %c1_i32 = arith.constant 1 : i32
    %0 = arith.muli %arg0, %c1_i32 : i32
    %1 = arith.addi %0, %arg1 : i32
    %c0_i32 = arith.constant 0 : i32
    %c0_i32_0 = arith.constant 0 : i32
    return %1, %c0_i32 : i32, i32
  }
  func.func @transform_4(%arg0: i32, %arg1: i32) -> (i32, i32, i32, i32) {
    %c0_i32 = arith.constant 0 : i32
    %c0_i32_0 = arith.constant 0 : i32
    %c0_i32_1 = arith.constant 0 : i32
    %c0_i32_2 = arith.constant 0 : i32
    return %arg0, %c0_i32, %c0_i32_0, %c0_i32_1 : i32, i32, i32, i32
  }
}

</mosaic_0001>

<llo_original>
// kernel: tpu_custom_call.1
$region0: #{tpu_custom_call.1}
  #allocation0 [shape = 'u32[]', space=smem, size = 0x4, offset = 0x4, fixed_abs, tag = 'smem constant byte address 0x4 - core index']
  #allocation1 [shape = 'u32[144,128]{1,0:T(1,128)}', space=vmem, size = 0x12000, scoped, tag = 'internal scratch']
  #allocation2 [shape = 'f32[8,1024]{1,0:T(8,128)}', space=vmem, size = 0x8000, scoped, tag = 'scratch operand']
  #allocation3 [shape = 'f32[8,1024]{1,0:T(8,128)}', space=vmem, size = 0x8000, scoped, tag = 'scratch operand']
  %s0 = inlined_call_operand.hbm [shape: f32[16,1024], index: 0, kind: input, shape index: {}]
  %s1 = inlined_call_operand.hbm [shape: f32[16,1024], index: 1, kind: input, shape index: {}]
  %s2 = inlined_call_operand.hbm [shape: f32[16,1024], index: 2, kind: input, shape index: {}]
  %s3 = inlined_call_operand.hbm [shape: f32[16,1024], index: 3, kind: input, shape index: {}]
  %s4 = inlined_call_operand.hbm [shape: f32[2,2,8,128], index: 4, kind: output, shape index: {}]
  %s5 = sld [smem:[#allocation0]]
  $region73: #{tpu_custom_call.1} parent=0
    _
  %s7 = ssub.s32 1, %s5
  %s8 = scalar_select 0, %s7, %s5
  $region1: #{tpu_custom_call.1} parent=0
    #allocation4 [shape = 'u8[65536]{0}', space=vmem, size = 0x10000, scoped, tag = 'input window, operand 0']
    #allocation5 [shape = 's32[2]{0}', space=sflag, size = 0x8, scoped, tag = 'scoped memory for tpu_custom_call.1']
    #allocation6 [shape = 's32[2]{0}', space=sflag, size = 0x8, scoped, tag = 'scoped memory for tpu_custom_call.1']
    #allocation7 [shape = 'u8[65536]{0}', space=vmem, size = 0x10000, scoped, tag = 'input window, operand 1']
    #allocation8 [shape = 's32[2]{0}', space=sflag, size = 0x8, scoped, tag = 'scoped memory for tpu_custom_call.1']
    #allocation9 [shape = 'u8[65536]{0}', space=vmem, size = 0x10000, scoped, tag = 'input window, operand 2']
    #allocation10 [shape = 'u8[65536]{0}', space=vmem, size = 0x10000, scoped, tag = 'input window, operand 3']
    #allocation11 [shape = 's32[2]{0}', space=sflag, size = 0x8, scoped, tag = 'scoped memory for tpu_custom_call.1']
    #allocation12 [shape = 'u8[16384]{0}', space=vmem, size = 0x4000, scoped, tag = 'output window, operand 0']
    %9 = vsyncpa [#allocation5], 0
    %s10 = scalar_lea.sflag [#allocation5], 1
    %11 = vsyncpa %s10, 0
    %12 = vsyncpa [#allocation8], 0
    %s13 = scalar_lea.sflag [#allocation8], 1
    %14 = vsyncpa %s13, 0
    %15 = vsyncpa [#allocation11], 0
    %s16 = scalar_lea.sflag [#allocation11], 1
    %17 = vsyncpa %s16, 0
    %18 = vsyncpa [#allocation6], 0
    %s19 = scalar_lea.sflag [#allocation6], 1
    %20 = vsyncpa %s19, 0
    loop: start=0, step=1, limit=4
    $region2: #{tpu_custom_call.1} parent=1 // loop_pre_header
      _
    $region3: #{tpu_custom_call.1} parent=1 // loop_header
      %s22 = sphi 0, %s26
      %p23 = scmp.ge.s32.totalorder %s22, 4
      %s29 = sphi 0, %s41
      %s30 = sphi 0, %s37
      %s31 = sphi 0, %s29
      %s32 = sphi 0, %s30
      %s33 = sphi 0, %s31
      %s34 = sphi 0, %s32
      %s46 = sphi 0, %s48
      %s49 = sphi 0, %s46
      %s50 = sphi 0, %s49
      %s66 = sphi 0, %s50
      %s74 = sphi 0, %s76
      %s77 = sphi 0, %s74
      %s78 = sphi 0, %s77
      %s94 = sphi 0, %s78
      %s102 = sphi 0, %s104
      %s105 = sphi 0, %s102
      %s106 = sphi 0, %s105
      %s122 = sphi 0, %s106
      %s130 = sphi 0, %s132
      %s133 = sphi 0, %s130
      %s134 = sphi 0, %s133
      %s150 = sphi 0, %s134
      %s156 = sphi 0, %s158
      %s159 = sphi 0, %s156
      %s160 = sphi 0, %s159
      %s176 = sphi 0, %s160
    $region4: #{tpu_custom_call.1} parent=1 // loop_header_branch
      %25 = sbr.rel (%p23) target = $region8
    $region5: #{tpu_custom_call.1} parent=1 // loop_body
      %s27 = ssub.s32 %s22, 1
      %s28 = ssub.s32 %s22, 2
      %s35 = sadd.s32 1, %s30
      %p36 = scmp.ge.s32.totalorder %s35, 1
      %s37 = scalar_select %p36, 0, %s35
      %s38 = sadd.s32 1, %s29
      %s39 = scalar_select %p36, %s38, %s29
      %p40 = scmp.ge.s32.totalorder %s39, 2
      %s41 = scalar_select %p40, 0, %s39
      %s42 = sadd.s32 %s29, %s30
      %s43 = sadd.s32 %s41, %s37
      %s44 = ssub.s32 %s42, %s43
      %p45 = scmp.eq.s32.totalorder %s44, 0
      %s47 = sadd.s32 %s46, 1
      %s48 = scalar_select %p45, %s46, %s47
      %p51 = pneg %p45
      %p52 = scmp.eq.s32.totalorder %s22, 1
      %p53 = por %p51, %p52
      %p54 = scmp.ne.s32.totalorder %s46, %s49
      %p55 = scmp.eq.s32.totalorder %s22, 0
      %p56 = por %p54, %p55
      %p57 = scmp.ne.s32.totalorder %s46, %s49
      %p58 = scmp.eq.s32.totalorder %s27, 1
      %p59 = por %p57, %p58
      %p60 = scmp.ne.s32.totalorder %s49, %s50
      %p61 = scmp.eq.s32.totalorder %s27, 0
      %p62 = por %p60, %p61
      %p63 = scmp.ne.s32.totalorder %s49, %s50
      %p64 = scmp.eq.s32.totalorder %s28, 1
      %p65 = por %p63, %p64
      %p67 = scmp.ne.s32.totalorder %s50, %s66
      %p68 = scmp.eq.s32.totalorder %s28, 0
      %p69 = por %p67, %p68
      %s70 = sadd.s32 %s29, %s30
      %s71 = sadd.s32 %s41, %s37
      %s72 = ssub.s32 %s70, %s71
      %p73 = scmp.eq.s32.totalorder %s72, 0
      %s75 = sadd.s32 %s74, 1
      %s76 = scalar_select %p73, %s74, %s75
      %p79 = pneg %p73
      %p80 = scmp.eq.s32.totalorder %s22, 1
      %p81 = por %p79, %p80
      %p82 = scmp.ne.s32.totalorder %s74, %s77
      %p83 = scmp.eq.s32.totalorder %s22, 0
      %p84 = por %p82, %p83
      %p85 = scmp.ne.s32.totalorder %s74, %s77
      %p86 = scmp.eq.s32.totalorder %s27, 1
      %p87 = por %p85, %p86
      %p88 = scmp.ne.s32.totalorder %s77, %s78
      %p89 = scmp.eq.s32.totalorder %s27, 0
      %p90 = por %p88, %p89
      %p91 = scmp.ne.s32.totalorder %s77, %s78
      %p92 = scmp.eq.s32.totalorder %s28, 1
      %p93 = por %p91, %p92
      %p95 = scmp.ne.s32.totalorder %s78, %s94
      %p96 = scmp.eq.s32.totalorder %s28, 0
      %p97 = por %p95, %p96
      %s98 = sadd.s32 %s29, %s30
      %s99 = sadd.s32 %s41, %s37
      %s100 = ssub.s32 %s98, %s99
      %p101 = scmp.eq.s32.totalorder %s100, 0
      %s103 = sadd.s32 %s102, 1
      %s104 = scalar_select %p101, %s102, %s103
      %p107 = pneg %p101
      %p108 = scmp.eq.s32.totalorder %s22, 1
      %p109 = por %p107, %p108
      %p110 = scmp.ne.s32.totalorder %s102, %s105
      %p111 = scmp.eq.s32.totalorder %s22, 0
      %p112 = por %p110, %p111
      %p113 = scmp.ne.s32.totalorder %s102, %s105
      %p114 = scmp.eq.s32.totalorder %s27, 1
      %p115 = por %p113, %p114
      %p116 = scmp.ne.s32.totalorder %s105, %s106
      %p117 = scmp.eq.s32.totalorder %s27, 0
      %p118 = por %p116, %p117
      %p119 = scmp.ne.s32.totalorder %s105, %s106
      %p120 = scmp.eq.s32.totalorder %s28, 1
      %p121 = por %p119, %p120
      %p123 = scmp.ne.s32.totalorder %s106, %s122
      %p124 = scmp.eq.s32.totalorder %s28, 0
      %p125 = por %p123, %p124
      %s126 = sadd.s32 %s29, %s30
      %s127 = sadd.s32 %s41, %s37
      %s128 = ssub.s32 %s126, %s127
      %p129 = scmp.eq.s32.totalorder %s128, 0
      %s131 = sadd.s32 %s130, 1
      %s132 = scalar_select %p129, %s130, %s131
      %p135 = pneg %p129
      %p136 = scmp.eq.s32.totalorder %s22, 1
      %p137 = por %p135, %p136
      %p138 = scmp.ne.s32.totalorder %s130, %s133
      %p139 = scmp.eq.s32.totalorder %s22, 0
      %p140 = por %p138, %p139
      %p141 = scmp.ne.s32.totalorder %s130, %s133
      %p142 = scmp.eq.s32.totalorder %s27, 1
      %p143 = por %p141, %p142
      %p144 = scmp.ne.s32.totalorder %s133, %s134
      %p145 = scmp.eq.s32.totalorder %s27, 0
      %p146 = por %p144, %p145
      %p147 = scmp.ne.s32.totalorder %s133, %s134
      %p148 = scmp.eq.s32.totalorder %s28, 1
      %p149 = por %p147, %p148
      %p151 = scmp.ne.s32.totalorder %s134, %s150
      %p152 = scmp.eq.s32.totalorder %s28, 0
      %p153 = por %p151, %p152
      %s154 = ssub.s32 %s29, %s41
      %p155 = scmp.eq.s32.totalorder %s154, 0
      %s157 = sadd.s32 %s156, 1
      %s158 = scalar_select %p155, %s156, %s157
      %p161 = pneg %p155
      %p162 = scmp.eq.s32.totalorder %s22, 1
      %p163 = por %p161, %p162
      %p164 = scmp.ne.s32.totalorder %s156, %s159
      %p165 = scmp.eq.s32.totalorder %s22, 0
      %p166 = por %p164, %p165
      %p167 = scmp.ne.s32.totalorder %s156, %s159
      %p168 = scmp.eq.s32.totalorder %s27, 1
      %p169 = por %p167, %p168
      %p170 = scmp.ne.s32.totalorder %s159, %s160
      %p171 = scmp.eq.s32.totalorder %s27, 0
      %p172 = por %p170, %p171
      %p173 = scmp.ne.s32.totalorder %s159, %s160
      %p174 = scmp.eq.s32.totalorder %s28, 1
      %p175 = por %p173, %p174
      %p177 = scmp.ne.s32.totalorder %s160, %s176
      %p178 = scmp.eq.s32.totalorder %s28, 0
      %p179 = por %p177, %p178
      %p180 = scmp.le.s32.totalorder 1, %s22
      %p181 = scmp.lt.s32.totalorder %s22, 3
      %p182 = pnand %p180, %p181
      %p183 = pneg %p182
      // Predicated region
      $region9: #{tpu_custom_call.1} parent=5 // pred_check
        _
      $region10: #{tpu_custom_call.1} parent=5 // pred_check_branch
        %185 = sbr.rel (%p182) target = $region12
      $region11: #{tpu_custom_call.1} parent=5 // pred_region
        %s186 = ssub.s32 %s22, 1
      $region12: #{tpu_custom_call.1} parent=5 // pred_fallthru
        _
      %p187 = scmp.lt.s32.totalorder %s22, 2
      // Predicated region
      $region13: #{tpu_custom_call.1} parent=5 // pred_check
        %p188 = pneg %p187
      $region14: #{tpu_custom_call.1} parent=5 // pred_check_branch
        %190 = sbr.rel (%p188) target = $region16
      $region15: #{tpu_custom_call.1} parent=5 // pred_region
        // Predicated region
        $region17: #{tpu_custom_call.1} parent=15 // pred_check
          %p191 = pneg %p56
        $region18: #{tpu_custom_call.1} parent=15 // pred_check_branch
          %193 = sbr.rel (%p191) target = $region20
        $region19: #{tpu_custom_call.1} parent=15 // pred_region
          %s194 = sand.u32 %s46, 1
          %s195 = scalar_lea.sflag [#allocation5], %s194
          %s196 = sand.u32 %s46, 1
          %s197 = smul.addr %s196, 64
          %s198 = scalar_lea.vmem [#allocation4], %s197
          %s199 = sadd.s32 %s29, %s30
          %s201 = ssub.s32 1024, 1024
          %202 = vsyncadd %s195, %s201
          %s203 = smul.addr %s199, 8
          %s204 = smul.addr %s203, 128
          %s205 = scalar_lea.hbm %s0, %s204
          %s207 = sshll.u32 %s198, 4
          %s208 = int_to_ptr.vmem [resolvable:$true] %s207
          %210 = dma.hbm_to_vmem [thread:$0]  %s205, 1024, %s208, %s195
        $region20: #{tpu_custom_call.1} parent=15 // pred_fallthru
          _
        // Predicated region
        $region21: #{tpu_custom_call.1} parent=15 // pred_check
          %p211 = pneg %p84
        $region22: #{tpu_custom_call.1} parent=15 // pred_check_branch
          %213 = sbr.rel (%p211) target = $region24
        $region23: #{tpu_custom_call.1} parent=15 // pred_region
          %s214 = sand.u32 %s22, 1
          %s215 = scalar_lea.sflag [#allocation8], %s214
          %s216 = sand.u32 %s74, 1
          %s217 = smul.addr %s216, 64
          %s218 = scalar_lea.vmem [#allocation7], %s217
          %s219 = sadd.s32 %s29, %s30
          %s221 = ssub.s32 1024, 1024
          %222 = vsyncadd %s215, %s221
          %s223 = smul.addr %s219, 8
          %s224 = smul.addr %s223, 128
          %s225 = scalar_lea.hbm %s1, %s224
          %s227 = sshll.u32 %s218, 4
          %s228 = int_to_ptr.vmem [resolvable:$true] %s227
          %230 = dma.hbm_to_vmem [thread:$0]  %s225, 1024, %s228, %s215
        $region24: #{tpu_custom_call.1} parent=15 // pred_fallthru
          _
        // Predicated region
        $region25: #{tpu_custom_call.1} parent=15 // pred_check
          %p231 = pneg %p112
        $region26: #{tpu_custom_call.1} parent=15 // pred_check_branch
          %233 = sbr.rel (%p231) target = $region28
        $region27: #{tpu_custom_call.1} parent=15 // pred_region
          %s234 = sand.u32 %s22, 1
          %s235 = scalar_lea.sflag [#allocation8], %s234
          %s236 = sand.u32 %s102, 1
          %s237 = smul.addr %s236, 64
          %s238 = scalar_lea.vmem [#allocation9], %s237
          %s239 = sadd.s32 %s29, %s30
          %s241 = ssub.s32 1024, 1024
          %242 = vsyncadd %s235, %s241
          %s243 = smul.addr %s239, 8
          %s244 = smul.addr %s243, 128
          %s245 = scalar_lea.hbm %s2, %s244
          %s247 = sshll.u32 %s238, 4
          %s248 = int_to_ptr.vmem [resolvable:$true] %s247
          %250 = dma.hbm_to_vmem [thread:$0]  %s245, 1024, %s248, %s235
        $region28: #{tpu_custom_call.1} parent=15 // pred_fallthru
          _
        // Predicated region
        $region29: #{tpu_custom_call.1} parent=15 // pred_check
          %p251 = pneg %p140
        $region30: #{tpu_custom_call.1} parent=15 // pred_check_branch
          %253 = sbr.rel (%p251) target = $region32
        $region31: #{tpu_custom_call.1} parent=15 // pred_region
          %s254 = sand.u32 %s130, 1
          %s255 = scalar_lea.sflag [#allocation11], %s254
          %s256 = sand.u32 %s130, 1
          %s257 = smul.addr %s256, 64
          %s258 = scalar_lea.vmem [#allocation10], %s257
          %s259 = sadd.s32 %s29, %s30
          %s261 = ssub.s32 1024, 1024
          %262 = vsyncadd %s255, %s261
          %s263 = smul.addr %s259, 8
          %s264 = smul.addr %s263, 128
          %s265 = scalar_lea.hbm %s3, %s264
          %s267 = sshll.u32 %s258, 4
          %s268 = int_to_ptr.vmem [resolvable:$true] %s267
          %270 = dma.hbm_to_vmem [thread:$0]  %s265, 1024, %s268, %s255
        $region32: #{tpu_custom_call.1} parent=15 // pred_fallthru
          _
      $region16: #{tpu_custom_call.1} parent=5 // pred_fallthru
        _
      %p271 = scmp.le.s32.totalorder 1, %s22
      %p272 = scmp.lt.s32.totalorder %s22, 3
      %p273 = pnand %p271, %p272
      %p274 = pneg %p273
      // Predicated region
      $region33: #{tpu_custom_call.1} parent=5 // pred_check
        _
      $region34: #{tpu_custom_call.1} parent=5 // pred_check_branch
        %276 = sbr.rel (%p273) target = $region36
      $region35: #{tpu_custom_call.1} parent=5 // pred_region
        %s277 = ssub.s32 %s22, 1
        %s278 = sand.u32 %s49, 1
        %s279 = scalar_lea.sflag [#allocation5], %s278
        %s280 = sand.u32 %s49, 1
        %s281 = smul.addr %s280, 64
        %s282 = scalar_lea.vmem [#allocation4], %s281
        // Predicated region
        $region37: #{tpu_custom_call.1} parent=35 // pred_check
          %p283 = pneg %p62
        $region38: #{tpu_custom_call.1} parent=35 // pred_check_branch
          %285 = sbr.rel (%p283) target = $region40
        $region39: #{tpu_custom_call.1} parent=35 // pred_region
          %286 = dma.done %s279, 1024
        $region40: #{tpu_custom_call.1} parent=35 // pred_fallthru
          _
        %s287 = sand.u32 %s27, 1
        %s288 = scalar_lea.sflag [#allocation8], %s287
        %s289 = sand.u32 %s77, 1
        %s290 = smul.addr %s289, 64
        %s291 = scalar_lea.vmem [#allocation7], %s290
        // Predicated region
        $region41: #{tpu_custom_call.1} parent=35 // pred_check
          %p292 = pneg %p90
        $region42: #{tpu_custom_call.1} parent=35 // pred_check_branch
          %294 = sbr.rel (%p292) target = $region44
        $region43: #{tpu_custom_call.1} parent=35 // pred_region
          %295 = dma.done %s288, 1024
        $region44: #{tpu_custom_call.1} parent=35 // pred_fallthru
          _
        %s296 = sand.u32 %s27, 1
        %s297 = scalar_lea.sflag [#allocation8], %s296
        %s298 = sand.u32 %s105, 1
        %s299 = smul.addr %s298, 64
        %s300 = scalar_lea.vmem [#allocation9], %s299
        // Predicated region
        $region45: #{tpu_custom_call.1} parent=35 // pred_check
          %p301 = pneg %p118
        $region46: #{tpu_custom_call.1} parent=35 // pred_check_branch
          %303 = sbr.rel (%p301) target = $region48
        $region47: #{tpu_custom_call.1} parent=35 // pred_region
          %304 = dma.done %s297, 1024
        $region48: #{tpu_custom_call.1} parent=35 // pred_fallthru
          _
        %s305 = sand.u32 %s133, 1
        %s306 = scalar_lea.sflag [#allocation11], %s305
        %s307 = sand.u32 %s133, 1
        %s308 = smul.addr %s307, 64
        %s309 = scalar_lea.vmem [#allocation10], %s308
        // Predicated region
        $region49: #{tpu_custom_call.1} parent=35 // pred_check
          %p310 = pneg %p146
        $region50: #{tpu_custom_call.1} parent=35 // pred_check_branch
          %312 = sbr.rel (%p310) target = $region52
        $region51: #{tpu_custom_call.1} parent=35 // pred_region
          %313 = dma.done %s306, 1024
        $region52: #{tpu_custom_call.1} parent=35 // pred_fallthru
          _
        %s314 = sand.u32 %s49, 1
        %s315 = scalar_lea.sflag [#allocation5], %s314
        %s316 = sand.u32 %s49, 1
        %s317 = smul.addr %s316, 64
        %s318 = scalar_lea.vmem [#allocation4], %s317
        %p319 = pneg %p62
        %p320 = pneg %p59
        %s321 = sand.u32 %s27, 1
        %s322 = scalar_lea.sflag [#allocation8], %s321
        %s323 = sand.u32 %s77, 1
        %s324 = smul.addr %s323, 64
        %s325 = scalar_lea.vmem [#allocation7], %s324
        %p326 = pneg %p90
        %p327 = pneg %p87
        %s328 = sand.u32 %s27, 1
        %s329 = scalar_lea.sflag [#allocation8], %s328
        %s330 = sand.u32 %s105, 1
        %s331 = smul.addr %s330, 64
        %s332 = scalar_lea.vmem [#allocation9], %s331
        %p333 = pneg %p118
        %p334 = pneg %p115
        %s335 = sand.u32 %s133, 1
        %s336 = scalar_lea.sflag [#allocation11], %s335
        %s337 = sand.u32 %s133, 1
        %s338 = smul.addr %s337, 64
        %s339 = scalar_lea.vmem [#allocation10], %s338
        %p340 = pneg %p146
        %p341 = pneg %p143
        %p342 = pneg %p172
        %p343 = pneg %p169
        %s344 = sand.u32 %s159, 1
        %s345 = scalar_lea.sflag [#allocation6], %s344
        %s346 = sand.u32 %s159, 1
        %s347 = smul.addr %s346, 16
        %s348 = scalar_lea.vmem [#allocation12], %s347
        %s349 = sadd.s32 %s31, %s32
        %s350 = sadd.s32 %s31, %s32
        %s351 = sadd.s32 %s31, %s32
        %s352 = sadd.s32 %s31, %s32
        %p353 = scmp.eq.s32.totalorder %s32, 0
        // Predicated region
        $region53: #{tpu_custom_call.1} parent=35 // pred_check
          %p354 = pneg %p353
        $region54: #{tpu_custom_call.1} parent=35 // pred_check_branch
          %356 = sbr.rel (%p354) target = $region56
        $region55: #{tpu_custom_call.1} parent=35 // pred_region
          %357 = vst [vmem:[#allocation2] sm:$0xff] 0.0
          %358 = vst [vmem:[#allocation2 + $0x8] sm:$0xff] 0.0
          %359 = vst [vmem:[#allocation2 + $0x10] sm:$0xff] 0.0
          %360 = vst [vmem:[#allocation2 + $0x18] sm:$0xff] 0.0
          %361 = vst [vmem:[#allocation2 + $0x20] sm:$0xff] 0.0
          %362 = vst [vmem:[#allocation2 + $0x28] sm:$0xff] 0.0
          %363 = vst [vmem:[#allocation2 + $0x30] sm:$0xff] 0.0
          %364 = vst [vmem:[#allocation2 + $0x38] sm:$0xff] 0.0
          %365 = vst [vmem:[#allocation3] sm:$0xff] 0.0
          %366 = vst [vmem:[#allocation3 + $0x8] sm:$0xff] 0.0
          %367 = vst [vmem:[#allocation3 + $0x10] sm:$0xff] 0.0
          %368 = vst [vmem:[#allocation3 + $0x18] sm:$0xff] 0.0
          %369 = vst [vmem:[#allocation3 + $0x20] sm:$0xff] 0.0
          %370 = vst [vmem:[#allocation3 + $0x28] sm:$0xff] 0.0
          %371 = vst [vmem:[#allocation3 + $0x30] sm:$0xff] 0.0
          %372 = vst [vmem:[#allocation3 + $0x38] sm:$0xff] 0.0
        $region56: #{tpu_custom_call.1} parent=35 // pred_fallthru
          _
        %v373 = vld [vmem:[%s282] sm:$0xff]
        %v374 = vld [vmem:[%s282 + $0x8] sm:$0xff]
        %v375 = vld [vmem:[%s282 + $0x10] sm:$0xff]
        %v376 = vld [vmem:[%s282 + $0x18] sm:$0xff]
        %v377 = vld [vmem:[%s282 + $0x20] sm:$0xff]
        %v378 = vld [vmem:[%s282 + $0x28] sm:$0xff]
        %v379 = vld [vmem:[%s282 + $0x30] sm:$0xff]
        %v380 = vld [vmem:[%s282 + $0x38] sm:$0xff]
        %v381 = vld [vmem:[%s291] sm:$0xff]
        %v382 = vld [vmem:[%s291 + $0x8] sm:$0xff]
        %v383 = vld [vmem:[%s291 + $0x10] sm:$0xff]
        %v384 = vld [vmem:[%s291 + $0x18] sm:$0xff]
        %v385 = vld [vmem:[%s291 + $0x20] sm:$0xff]
        %v386 = vld [vmem:[%s291 + $0x28] sm:$0xff]
        %v387 = vld [vmem:[%s291 + $0x30] sm:$0xff]
        %v388 = vld [vmem:[%s291 + $0x38] sm:$0xff]
        %v389 = vsub.f32 %v373, %v381
        %v390 = vsub.f32 %v374, %v382
        %v391 = vsub.f32 %v375, %v383
        %v392 = vsub.f32 %v376, %v384
        %v393 = vsub.f32 %v377, %v385
        %v394 = vsub.f32 %v378, %v386
        %v395 = vsub.f32 %v379, %v387
        %v396 = vsub.f32 %v380, %v388
        %v397 = vld [vmem:[%s300] sm:$0xff]
        %v398 = vld [vmem:[%s300 + $0x8] sm:$0xff]
        %v399 = vld [vmem:[%s300 + $0x10] sm:$0xff]
        %v400 = vld [vmem:[%s300 + $0x18] sm:$0xff]
        %v401 = vld [vmem:[%s300 + $0x20] sm:$0xff]
        %v402 = vld [vmem:[%s300 + $0x28] sm:$0xff]
        %v403 = vld [vmem:[%s300 + $0x30] sm:$0xff]
        %v404 = vld [vmem:[%s300 + $0x38] sm:$0xff]
        %v405 = vld [vmem:[%s309] sm:$0xff]
        %v406 = vld [vmem:[%s309 + $0x8] sm:$0xff]
        %v407 = vld [vmem:[%s309 + $0x10] sm:$0xff]
        %v408 = vld [vmem:[%s309 + $0x18] sm:$0xff]
        %v409 = vld [vmem:[%s309 + $0x20] sm:$0xff]
        %v410 = vld [vmem:[%s309 + $0x28] sm:$0xff]
        %v411 = vld [vmem:[%s309 + $0x30] sm:$0xff]
        %v412 = vld [vmem:[%s309 + $0x38] sm:$0xff]
        %v413 = vsub.f32 %v397, %v405
        %v414 = vsub.f32 %v398, %v406
        %v415 = vsub.f32 %v399, %v407
        %v416 = vsub.f32 %v400, %v408
        %v417 = vsub.f32 %v401, %v409
        %v418 = vsub.f32 %v402, %v410
        %v419 = vsub.f32 %v403, %v411
        %v420 = vsub.f32 %v404, %v412
        %v421 = vld [vmem:[#allocation2] sm:$0xff]
        %v422 = vld [vmem:[#allocation2 + $0x8] sm:$0xff]
        %v423 = vld [vmem:[#allocation2 + $0x10] sm:$0xff]
        %v424 = vld [vmem:[#allocation2 + $0x18] sm:$0xff]
        %v425 = vld [vmem:[#allocation2 + $0x20] sm:$0xff]
        %v426 = vld [vmem:[#allocation2 + $0x28] sm:$0xff]
        %v427 = vld [vmem:[#allocation2 + $0x30] sm:$0xff]
        %v428 = vld [vmem:[#allocation2 + $0x38] sm:$0xff]
        %v429 = vmul.f32 %v389, %v389
        %v430 = vmul.f32 %v390, %v390
        %v431 = vmul.f32 %v391, %v391
        %v432 = vmul.f32 %v392, %v392
        %v433 = vmul.f32 %v393, %v393
        %v434 = vmul.f32 %v394, %v394
        %v435 = vmul.f32 %v395, %v395
        %v436 = vmul.f32 %v396, %v396
        %v437 = vadd.f32 %v421, %v429
        %v438 = vadd.f32 %v422, %v430
        %v439 = vadd.f32 %v423, %v431
        %v440 = vadd.f32 %v424, %v432
        %v441 = vadd.f32 %v425, %v433
        %v442 = vadd.f32 %v426, %v434
        %v443 = vadd.f32 %v427, %v435
        %v444 = vadd.f32 %v428, %v436
        %445 = vst [vmem:[#allocation2] sm:$0xff] %v437
        %446 = vst [vmem:[#allocation2 + $0x8] sm:$0xff] %v438
        %447 = vst [vmem:[#allocation2 + $0x10] sm:$0xff] %v439
        %448 = vst [vmem:[#allocation2 + $0x18] sm:$0xff] %v440
        %449 = vst [vmem:[#allocation2 + $0x20] sm:$0xff] %v441
        %450 = vst [vmem:[#allocation2 + $0x28] sm:$0xff] %v442
        %451 = vst [vmem:[#allocation2 + $0x30] sm:$0xff] %v443
        %452 = vst [vmem:[#allocation2 + $0x38] sm:$0xff] %v444
        %v453 = vld [vmem:[#allocation3] sm:$0xff]
        %v454 = vld [vmem:[#allocation3 + $0x8] sm:$0xff]
        %v455 = vld [vmem:[#allocation3 + $0x10] sm:$0xff]
        %v456 = vld [vmem:[#allocation3 + $0x18] sm:$0xff]
        %v457 = vld [vmem:[#allocation3 + $0x20] sm:$0xff]
        %v458 = vld [vmem:[#allocation3 + $0x28] sm:$0xff]
        %v459 = vld [vmem:[#allocation3 + $0x30] sm:$0xff]
        %v460 = vld [vmem:[#allocation3 + $0x38] sm:$0xff]
        %v461 = vmul.f32 %v413, %v413
        %v462 = vmul.f32 %v414, %v414
        %v463 = vmul.f32 %v415, %v415
        %v464 = vmul.f32 %v416, %v416
        %v465 = vmul.f32 %v417, %v417
        %v466 = vmul.f32 %v418, %v418
        %v467 = vmul.f32 %v419, %v419
        %v468 = vmul.f32 %v420, %v420
        %v469 = vadd.f32 %v453, %v461
        %v470 = vadd.f32 %v454, %v462
        %v471 = vadd.f32 %v455, %v463
        %v472 = vadd.f32 %v456, %v464
        %v473 = vadd.f32 %v457, %v465
        %v474 = vadd.f32 %v458, %v466
        %v475 = vadd.f32 %v459, %v467
        %v476 = vadd.f32 %v460, %v468
        %477 = vst [vmem:[#allocation3] sm:$0xff] %v469
        %478 = vst [vmem:[#allocation3 + $0x8] sm:$0xff] %v470
        %479 = vst [vmem:[#allocation3 + $0x10] sm:$0xff] %v471
        %480 = vst [vmem:[#allocation3 + $0x18] sm:$0xff] %v472
        %481 = vst [vmem:[#allocation3 + $0x20] sm:$0xff] %v473
        %482 = vst [vmem:[#allocation3 + $0x28] sm:$0xff] %v474
        %483 = vst [vmem:[#allocation3 + $0x30] sm:$0xff] %v475
        %484 = vst [vmem:[#allocation3 + $0x38] sm:$0xff] %v476
        // Predicated region
        $region57: #{tpu_custom_call.1} parent=35 // pred_check
          %p485 = pneg %p353
        $region58: #{tpu_custom_call.1} parent=35 // pred_check_branch
          %487 = sbr.rel (%p485) target = $region60
        $region59: #{tpu_custom_call.1} parent=35 // pred_region
          %v488 = vld [vmem:[#allocation2] sm:$0xff]
          %v489 = vld [vmem:[#allocation2 + $0x8] sm:$0xff]
          %v490 = vld [vmem:[#allocation2 + $0x10] sm:$0xff]
          %v491 = vld [vmem:[#allocation2 + $0x18] sm:$0xff]
          %v492 = vld [vmem:[#allocation2 + $0x20] sm:$0xff]
          %v493 = vld [vmem:[#allocation2 + $0x28] sm:$0xff]
          %v494 = vld [vmem:[#allocation2 + $0x30] sm:$0xff]
          %v495 = vld [vmem:[#allocation2 + $0x38] sm:$0xff]
          %v496 = vadd.f32 %v488, %v489
          %v497 = vadd.f32 %v496, %v490
          %v498 = vadd.f32 %v497, %v491
          %v499 = vadd.f32 %v498, %v492
          %v500 = vadd.f32 %v499, %v493
          %v501 = vadd.f32 %v500, %v494
          %v502 = vadd.f32 %v501, %v495
          %503 = vadd.xlane.f32.xlu0 %v502
          %v504 = vpop.xlane.xlu0 %503
          %v505 = vrot.slane %v504, 4
          %v506 = vadd.f32 %v504, %v505
          %v507 = vrot.slane %v506, 2
          %v508 = vadd.f32 %v506, %v507
          %v509 = vrot.slane %v508, 1
          %v510 = vadd.f32 %v508, %v509
          %s511 = vtos %v510
          %v512 = vld [vmem:[#allocation3] sm:$0xff]
          %v513 = vld [vmem:[#allocation3 + $0x8] sm:$0xff]
          %v514 = vld [vmem:[#allocation3 + $0x10] sm:$0xff]
          %v515 = vld [vmem:[#allocation3 + $0x18] sm:$0xff]
          %v516 = vld [vmem:[#allocation3 + $0x20] sm:$0xff]
          %v517 = vld [vmem:[#allocation3 + $0x28] sm:$0xff]
          %v518 = vld [vmem:[#allocation3 + $0x30] sm:$0xff]
          %v519 = vld [vmem:[#allocation3 + $0x38] sm:$0xff]
          %v520 = vadd.f32 %v512, %v513
          %v521 = vadd.f32 %v520, %v514
          %v522 = vadd.f32 %v521, %v515
          %v523 = vadd.f32 %v522, %v516
          %v524 = vadd.f32 %v523, %v517
          %v525 = vadd.f32 %v524, %v518
          %v526 = vadd.f32 %v525, %v519
          %527 = vadd.xlane.f32.xlu0 %v526
          %v528 = vpop.xlane.xlu0 %527
          %v529 = vrot.slane %v528, 4
          %v530 = vadd.f32 %v528, %v529
          %v531 = vrot.slane %v530, 2
          %v532 = vadd.f32 %v530, %v531
          %v533 = vrot.slane %v532, 1
          %v534 = vadd.f32 %v532, %v533
          %s535 = vtos %v534
          %v536 = vstv %s511
          %v537 = vadd.f32 %v536, 0.0
          %538 = vst [vmem:[%s348] sm:$0xff] %v537
          %v539 = vstv %s535
          %v540 = vadd.f32 %v539, 0.0
          %s541 = scalar_lea.vmem %s348, 8 [#allocation12]
          %542 = vst [vmem:[%s541] sm:$0xff] %v540
        $region60: #{tpu_custom_call.1} parent=35 // pred_fallthru
          _
        %s543 = sand.u32 %s159, 1
        %s544 = scalar_lea.sflag [#allocation6], %s543
        %s545 = sand.u32 %s159, 1
        %s546 = smul.addr %s545, 16
        %s547 = scalar_lea.vmem [#allocation12], %s546
        // Predicated region
        $region61: #{tpu_custom_call.1} parent=35 // pred_check
          %p548 = pneg %p169
        $region62: #{tpu_custom_call.1} parent=35 // pred_check_branch
          %550 = sbr.rel (%p548) target = $region64
        $region63: #{tpu_custom_call.1} parent=35 // pred_region
          %s552 = ssub.s32 256, 256
          %553 = vsyncadd %s544, %s552
          %s554 = smul.addr %s31, 2
          %s555 = smul.addr %s554, 128
          %s556 = scalar_lea.hbm %s4, %s555
          %s557 = sshll.u32 %s547, 4
          %s558 = int_to_ptr.vmem [resolvable:$true] %s557
          %563 = dma.vmem_to_hbm [thread:$0]  %s558, 256, %s556, %s544, 128, 128, 8
        $region64: #{tpu_custom_call.1} parent=35 // pred_fallthru
          _
      $region36: #{tpu_custom_call.1} parent=5 // pred_fallthru
        _
      %p564 = scmp.le.s32.totalorder 2, %s22
      // Predicated region
      $region65: #{tpu_custom_call.1} parent=5 // pred_check
        %p565 = pneg %p564
      $region66: #{tpu_custom_call.1} parent=5 // pred_check_branch
        %567 = sbr.rel (%p565) target = $region68
      $region67: #{tpu_custom_call.1} parent=5 // pred_region
        %s568 = ssub.s32 %s22, 2
        // Predicated region
        $region69: #{tpu_custom_call.1} parent=67 // pred_check
          %p569 = pneg %p175
        $region70: #{tpu_custom_call.1} parent=67 // pred_check_branch
          %571 = sbr.rel (%p569) target = $region72
        $region71: #{tpu_custom_call.1} parent=67 // pred_region
          %s572 = sand.u32 %s160, 1
          %s573 = scalar_lea.sflag [#allocation6], %s572
          %s574 = sand.u32 %s160, 1
          %s575 = smul.addr %s574, 16
          %s576 = scalar_lea.vmem [#allocation12], %s575
          %577 = dma.done %s573, 256
        $region72: #{tpu_custom_call.1} parent=67 // pred_fallthru
          _
      $region68: #{tpu_custom_call.1} parent=5 // pred_fallthru
        _
    $region6: #{tpu_custom_call.1} parent=1 // loop_footer
      %s26 = sadd.s32 1, %s22
    $region7: #{tpu_custom_call.1} parent=1 // loop_footer_branch
      %21 = sbr.rel target = $region3
    $region8: #{tpu_custom_call.1} parent=1 // loop_exit
      _
    %578 = vsyncpa [#allocation5], 1
    %s579 = scalar_lea.sflag [#allocation5], 1
    %580 = vsyncpa %s579, 1
    %581 = vsyncpa [#allocation8], 1
    %s582 = scalar_lea.sflag [#allocation8], 1
    %583 = vsyncpa %s582, 1
    %584 = vsyncpa [#allocation11], 1
    %s585 = scalar_lea.sflag [#allocation11], 1
    %586 = vsyncpa %s585, 1
    %587 = vsyncpa [#allocation6], 1
    %s588 = scalar_lea.sflag [#allocation6], 1
    %589 = vsyncpa %s588, 1

</llo_original>
